<compile_context>
chip_gen: v5e
topology: v5e:2x2
jax: 0.10.0
libtpu: 0.0.40
codegen_flags: <defaults>
</compile_context>

<pallas_src>
import functools

import jax
import jax.numpy as jnp
from jax import lax
from jax.experimental import pallas as pl
from jax.experimental.pallas import tpu as pltpu


_TARGET_TILE_BYTES = 8 * 1024 * 1024   # ~8 MiB x-tile; x+out double-buffered
                                       # ~= 32 MiB -> fits v7x 64 MiB VMEM with
                                       # headroom, near roofline on v5e/v6e.
_MIN_GRID_STEPS = 4                    # keep >=4 row steps when S allows so the
                                       # auto-pipeline has work to overlap and
                                       # v7x's 2nd TensorCore gets a share.


def _round_down(v, m):
    return max(m, (v // m) * m)


def _choose_tiles(S, BD, itemsize, block_rows=None):
    """Pick (row_tile, lane_tile) for the 2-D [S, B*D] view."""
    # Dtype-aware sublane granularity: f32 -> 8, bf16 -> 16, int8/fp8 -> 32.
    sub = max(8, 32 // itemsize)

    # Lane axis: keep the full (lane-dense) BD unless even a minimal-height
    # slab would blow the tile budget; then tile lanes in multiples of 128.
    if BD * itemsize * sub <= _TARGET_TILE_BYTES or BD <= 128:
        tl = BD
    else:
        tl = min(BD, _round_down(_TARGET_TILE_BYTES // (sub * itemsize), 128))

    if block_rows is not None:
        ts = S if block_rows >= S else _round_down(min(block_rows, S), sub)
        return ts, tl

    ts = _round_down(_TARGET_TILE_BYTES // max(1, tl * itemsize), sub)
    # Don't collapse to a single grid step when S is big enough for >=4 steps.
    if S >= _MIN_GRID_STEPS * sub:
        ts = min(ts, _round_down(S // _MIN_GRID_STEPS, sub))
    if ts >= S:
        ts = S                          # full-extent block is always legal
    return ts, tl


def _pe_add_kernel(x_ref, pe_ref, o_ref):
    # x_ref/o_ref: (TS, TL) ; pe_ref: (1, TL) broadcasts over rows.
    o_ref[...] = x_ref[...] + pe_ref[...]


def _pe_add_dropout_kernel(x_ref, pe_ref, o_ref, *, rate, seed, bd_total):
    # Training-mode dropout.  Counter-based hash (murmur3 fmix32) on the global
    # element index: no TPU-only PRNG primitives, bit-reproducible across
    # tilings, streams separated by the xor'ed seed.
    # TODO(synk): cannot bit-match torch's RNG stream; distributional semantics
    # (keep prob 1-p, scale 1/(1-p)) match.
    y = x_ref[...] + pe_ref[...]
    ts, tl = y.shape
    r0 = pl.program_id(0) * ts
    c0 = pl.program_id(1) * tl
    rows = (lax.broadcasted_iota(jnp.int32, (ts, tl), 0) + r0).astype(jnp.uint32)
    cols = (lax.broadcasted_iota(jnp.int32, (ts, tl), 1) + c0).astype(jnp.uint32)
    h = rows * jnp.uint32(bd_total) + cols
    h = h ^ jnp.uint32(seed & 0xFFFFFFFF)
    h = h * jnp.uint32(0x9E3779B1)
    h = h ^ (h >> 16)
    h = h * jnp.uint32(0x85EBCA6B)
    h = h ^ (h >> 13)
    h = h * jnp.uint32(0xC2B2AE35)
    h = h ^ (h >> 16)
    # 24-bit threshold compare (both sides < 2^31 -> signedness-safe).
    thr24 = min(max(int(round(rate * (1 << 24))), 0), (1 << 24) - 1)
    keep = (h >> 8) >= jnp.uint32(thr24)
    scale = jnp.asarray(1.0 / (1.0 - rate), y.dtype)
    o_ref[...] = jnp.where(keep, y * scale, jnp.zeros_like(y))


def learned_positional_encoding(x, pe, *, flip=False, training=False,
                                dropout_rate=0.1, seed=0, block_rows=None,
                                donate_x=False):
    """Pallas equivalent of LearnedPositionalEncoding.forward.

    x : [S, B, D]  (seq_len, batch_size, d_model)
    pe: [max_len, D] learned positional table.
    """
    S, B, D = x.shape
    if B > pe.shape[0]:
        raise ValueError(f"batch size {B} exceeds pe table length {pe.shape[0]}")

    # Glue (plain JAX): slice / flip / cast the positional table (torch.flip).
    pe_slice = pe[:B]
    if flip:
        pe_slice = pe_slice[::-1]
    pe_slice = pe_slice.astype(x.dtype)

    BD = B * D
    # Lane-dense 2-D view: last dim B*D (multiple of 128 for typical shapes).
    x2d = x.reshape(S, BD)
    pe2d = pe_slice.reshape(1, BD)

    itemsize = jnp.dtype(x.dtype).itemsize
    ts, tl = _choose_tiles(S, BD, itemsize, block_rows)
    grid = (pl.cdiv(S, ts), pl.cdiv(BD, tl))

    # Derive the VMEM limit from actual pipelined buffer bytes (+50% slack),
    # not a flat 64 MiB: x and out are double-buffered, pe single-buffered.
    tile_bytes = ts * tl * itemsize
    needed = 4 * tile_bytes + 2 * tl * itemsize
    vmem_limit = min(max(int(needed * 1.5) + (1 << 20), 16 * 1024 * 1024),
                     48 * 1024 * 1024)

    cparams = pltpu.CompilerParams(
        dimension_semantics=("parallel", "parallel"),   # grid steps independent
        vmem_limit_bytes=vmem_limit,
    )

    io_alias = {0: 0} if donate_x else {}               # out may reuse x buffer

    use_dropout = training and dropout_rate > 0.0
    if use_dropout and dropout_rate >= 1.0:
        # Degenerate p >= 1: everything dropped.
        return jnp.zeros_like(x)

    if not use_dropout:
        # Eval mode: nn.Dropout is identity.
        kernel = _pe_add_kernel
    else:
        kernel = functools.partial(_pe_add_dropout_kernel,
                                   rate=float(dropout_rate),
                                   seed=int(seed),
                                   bd_total=BD)

    # TODO(synk): a standalone broadcast-add(+dropout) is a full HBM round trip;
    # in a real model this should be fused into the adjacent producer/consumer —
    # that fusion dwarfs all in-kernel tuning at ~0.25 flop/byte intensity.
    out2d = pl.pallas_call(
        kernel,
        out_shape=jax.ShapeDtypeStruct((S, BD), x.dtype),
        grid_spec=pltpu.PrefetchScalarGridSpec(
            num_scalar_prefetch=0,
            grid=grid,
            in_specs=[
                pl.BlockSpec((ts, tl), lambda i, j: (i, j)),
                pl.BlockSpec((1, tl), lambda i, j: (0, j),
                             pipeline_mode=pl.Buffered(1)),
            ],
            out_specs=pl.BlockSpec((ts, tl), lambda i, j: (i, j)),
        ),
        compiler_params=cparams,
        input_output_aliases=io_alias,
    )(x2d, pe2d)
    return out2d.reshape(S, B, D)


if __name__ == "__main__":
    # Deterministic parameter + input construction (synthetic, no checkpoints).
    key = jax.random.PRNGKey(0)
    k_x, k_pe, k_x2, k_x3 = jax.random.split(key, 4)

    S, B, D = 8, 4, 32          # seq_len, batch_size, d_model -> B*D = 128 lanes
    MAX_LEN = 16                # small stand-in for max_len=5000

    x = jax.random.normal(k_x, (S, B, D), dtype=jnp.float32)
    pe = jax.random.normal(k_pe, (MAX_LEN, D), dtype=jnp.float32)  # nn.Parameter

    # --- eval mode, flip=False (nn.Dropout is identity) ---
    out = jax.block_until_ready(
        learned_positional_encoding(x, pe, flip=False, training=False))
    ref = x + pe[:B][None, :, :]
    assert out.shape == (S, B, D) and out.dtype == x.dtype
    assert jnp.allclose(out, ref, atol=1e-6), "flip=False mismatch"

    # --- eval mode, flip=True ---
    out_f = jax.block_until_ready(
        learned_positional_encoding(x, pe, flip=True, training=False))
    ref_f = x + pe[:B][::-1][None, :, :]
    assert jnp.allclose(out_f, ref_f, atol=1e-6), "flip=True mismatch"

    # --- multi-block grid + padded last block (S=20 rows, 8-row tiles) ---
    S2 = 20
    x2 = jax.random.normal(k_x2, (S2, B, D), dtype=jnp.float32)
    out2 = jax.block_until_ready(
        learned_positional_encoding(x2, pe, training=False, block_rows=8))
    ref2 = x2 + pe[:B][None, :, :]
    assert jnp.allclose(out2, ref2, atol=1e-6), "multi-block mismatch"

    # --- auto tiling picks a multi-step grid (>= 4 row steps) ---
    S3 = 64
    x3 = jax.random.normal(k_x3, (S3, B, D), dtype=jnp.float32)
    out3 = jax.block_until_ready(learned_positional_encoding(x3, pe))
    ref3 = x3 + pe[:B][None, :, :]
    assert jnp.allclose(out3, ref3, atol=1e-6), "auto-tiled mismatch"

    # --- training mode: every element is either dropped (0) or the scaled sum ---
    p = 0.1
    out_t = jax.block_until_ready(
        learned_positional_encoding(x, pe, flip=False, training=True,
                                    dropout_rate=p, seed=123))
    scaled = ref / (1.0 - p)
    is_zero = jnp.isclose(out_t, 0.0, atol=1e-6)
    is_kept = jnp.isclose(out_t, scaled, rtol=1e-5, atol=1e-5)
    assert out_t.shape == (S, B, D) and bool(jnp.all(is_zero | is_kept)), \
        "dropout values mismatch"
    keep_frac = float(jnp.mean(is_kept.astype(jnp.float32)))
    assert 0.7 < keep_frac < 0.999, f"dropout keep fraction off: {keep_frac}"

    # --- dropout mask is bit-reproducible across tilings (global-index hash) ---
    out_ta = jax.block_until_ready(
        learned_positional_encoding(x2, pe, training=True, dropout_rate=p, seed=7))
    out_tb = jax.block_until_ready(
        learned_positional_encoding(x2, pe, training=True, dropout_rate=p, seed=7,
                                    block_rows=8))
    assert jnp.array_equal(out_ta, out_tb), "dropout not tiling-invariant"

    print("KERNEL_OK")
</pallas_src>

<mosaic_0001>
module attributes {stable_mosaic.version = 11 : i64} {
  func.func @_pe_add_kernel(%arg0: i32, %arg1: i32, %arg2: memref<8x128xf32, #tpu.memory_space<vmem>>, %arg3: memref<1x128xf32, #tpu.memory_space<vmem>>, %arg4: memref<8x128xf32, #tpu.memory_space<vmem>>) attributes {dimension_semantics = [#tpu.dimension_semantics<parallel>, #tpu.dimension_semantics<parallel>], iteration_bounds = array<i64: 1, 1>, scalar_prefetch = 0 : i64, scratch_operands = 0 : i64, tpu.core_type = #tpu.core_type<tc>, window_params = [{transform_indices = @transform_0, window_bounds = array<i64: 8, 128>}, {pipeline_mode = #tpu.pipeline_mode<synchronous>, transform_indices = @transform_1, window_bounds = array<i64: 1, 128>}, {transform_indices = @transform_2, window_bounds = array<i64: 8, 128>}]} {
    %c0 = arith.constant 0 : index
    %c0_0 = arith.constant 0 : index
    %0 = vector.load %arg2[%c0, %c0_0] : memref<8x128xf32, #tpu.memory_space<vmem>>, vector<8x128xf32>
    %c0_1 = arith.constant 0 : index
    %c0_2 = arith.constant 0 : index
    %1 = vector.load %arg3[%c0_1, %c0_2] : memref<1x128xf32, #tpu.memory_space<vmem>>, vector<1x128xf32>
    %2 = vector.broadcast %1 : vector<1x128xf32> to vector<8x128xf32>
    %3 = arith.addf %0, %2 : vector<8x128xf32>
    %c0_3 = arith.constant 0 : index
    %c0_4 = arith.constant 0 : index
    %4 = vector.load %arg4[%c0_3, %c0_4] : memref<8x128xf32, #tpu.memory_space<vmem>>, vector<8x128xf32>
    tpu.vector_store %arg4[%c0_3, %c0_4], %3 {strides = array<i32>} : memref<8x128xf32, #tpu.memory_space<vmem>>, vector<8x128xf32>,
    return
  }
  func.func @transform_0(%arg0: i32, %arg1: i32) -> (i32, i32) {
    %c0_i32 = arith.constant 0 : i32
    return %arg0, %arg1 : i32, i32
  }
  func.func @transform_1(%arg0: i32, %arg1: i32) -> (i32, i32) {
    %c0_i32 = arith.constant 0 : i32
    %c0_i32_0 = arith.constant 0 : i32
    return %c0_i32, %arg1 : i32, i32
  }
  func.func @transform_2(%arg0: i32, %arg1: i32) -> (i32, i32) {
    %c0_i32 = arith.constant 0 : i32
    return %arg0, %arg1 : i32, i32
  }
}

</mosaic_0001>

<llo_original>
// kernel: tpu_custom_call.1
$region0: #{tpu_custom_call.1}
  #allocation0 [shape = 'u32[]', space=smem, size = 0x4, offset = 0x4, fixed_abs, tag = 'smem constant byte address 0x4 - core index']
  #allocation1 [shape = 'u32[72,128]{1,0:T(1,128)}', space=vmem, size = 0x9000, scoped, tag = 'internal scratch']
  %s0 = inlined_call_operand.hbm [shape: f32[8,128], index: 0, kind: input, shape index: {}]
  %s1 = inlined_call_operand.hbm [shape: f32[1,128], index: 1, kind: input, shape index: {}]
  %s2 = inlined_call_operand.hbm [shape: f32[8,128], index: 2, kind: output, shape index: {}]
  %s3 = sld [smem:[#allocation0]]
  $region26: #{tpu_custom_call.1} parent=0
    _
  %s5 = ssub.s32 1, %s3
  %s6 = scalar_select 0, %s5, %s3
  $region1: #{tpu_custom_call.1} parent=0
    #allocation2 [shape = 'u8[4096]{0}', space=vmem, size = 0x1000, scoped, tag = 'input window, operand 0, single buffered']
    #allocation3 [shape = 's32[1]{0}', space=sflag, size = 0x4, scoped, tag = 'scoped memory for tpu_custom_call.1']
    #allocation4 [shape = 's32[1]{0}', space=sflag, size = 0x4, scoped, tag = 'scoped memory for tpu_custom_call.1']
    #allocation5 [shape = 'u8[512]{0}', space=vmem, size = 0x400, scoped, tag = 'input window, operand 1, single buffered']
    #allocation6 [shape = 's32[1]{0}', space=sflag, size = 0x4, scoped, tag = 'scoped memory for tpu_custom_call.1']
    #allocation7 [shape = 'u8[4096]{0}', space=vmem, size = 0x1000, scoped, tag = 'output window, operand 0, single buffered']
    %7 = vsyncpa [#allocation3], 0
    %8 = vsyncpa [#allocation6], 0
    %9 = vsyncpa [#allocation4], 0
    // Predicated region
    $region2: #{tpu_custom_call.1} parent=1 // pred_check
      _
    $region3: #{tpu_custom_call.1} parent=1 // pred_check_branch
      %11 = sbr.rel (0) target = $region5
    $region4: #{tpu_custom_call.1} parent=1 // pred_region
      %13 = vsyncadd [#allocation3], 0
      %s15 = sshll.u32 %s0, 4
      %s16 = int_to_ptr.hbm [resolvable:$true] %s15
      %s17 = sshll.u32 [#allocation2], 4
      %s18 = int_to_ptr.vmem [resolvable:$true] %s17
      %20 = dma.hbm_to_vmem [thread:$0]  %s16, 128, %s18, [#allocation3]
    $region5: #{tpu_custom_call.1} parent=1 // pred_fallthru
      _
    // Predicated region
    $region6: #{tpu_custom_call.1} parent=1 // pred_check
      _
    $region7: #{tpu_custom_call.1} parent=1 // pred_check_branch
      %22 = sbr.rel (0) target = $region9
    $region8: #{tpu_custom_call.1} parent=1 // pred_region
      %24 = vsyncadd [#allocation6], 0
      %s26 = sshll.u32 %s1, 4
      %s27 = int_to_ptr.hbm [resolvable:$true] %s26
      %s28 = sshll.u32 [#allocation5], 4
      %s29 = int_to_ptr.vmem [resolvable:$true] %s28
      %31 = dma.hbm_to_vmem [thread:$0]  %s27, 16, %s29, [#allocation6]
    $region9: #{tpu_custom_call.1} parent=1 // pred_fallthru
      _
    // Predicated region
    $region10: #{tpu_custom_call.1} parent=1 // pred_check
      _
    $region11: #{tpu_custom_call.1} parent=1 // pred_check_branch
      %33 = sbr.rel (0) target = $region13
    $region12: #{tpu_custom_call.1} parent=1 // pred_region
      %35 = dma.done [#allocation3], 128
    $region13: #{tpu_custom_call.1} parent=1 // pred_fallthru
      _
    // Predicated region
    $region14: #{tpu_custom_call.1} parent=1 // pred_check
      _
    $region15: #{tpu_custom_call.1} parent=1 // pred_check_branch
      %37 = sbr.rel (0) target = $region17
    $region16: #{tpu_custom_call.1} parent=1 // pred_region
      %39 = dma.done [#allocation6], 16
    $region17: #{tpu_custom_call.1} parent=1 // pred_fallthru
      _
    %v40 = vld [vmem:[#allocation2] sm:$0xff]
    %v41 = vld [vmem:[#allocation5] sm:$0x1]
    %v43 = vperm.slane %v41, 0
    %v45 = vadd.f32 %v40, %v43
    %46 = vst [vmem:[#allocation7] sm:$0xff] %v45
    // Predicated region
    $region18: #{tpu_custom_call.1} parent=1 // pred_check
      _
    $region19: #{tpu_custom_call.1} parent=1 // pred_check_branch
      %48 = sbr.rel (0) target = $region21
    $region20: #{tpu_custom_call.1} parent=1 // pred_region
      %50 = vsyncadd [#allocation4], 0
      %s52 = sshll.u32 [#allocation7], 4
      %s53 = int_to_ptr.vmem [resolvable:$true] %s52
      %s54 = sshll.u32 %s2, 4
      %s55 = int_to_ptr.hbm [resolvable:$true] %s54
      %57 = dma.vmem_to_hbm [thread:$0]  %s53, 128, %s55, [#allocation4]
    $region21: #{tpu_custom_call.1} parent=1 // pred_fallthru
      _
    // Predicated region
    $region22: #{tpu_custom_call.1} parent=1 // pred_check
      _
    $region23: #{tpu_custom_call.1} parent=1 // pred_check_branch
      %59 = sbr.rel (0) target = $region25
    $region24: #{tpu_custom_call.1} parent=1 // pred_region
      %61 = dma.done [#allocation4], 128
    $region25: #{tpu_custom_call.1} parent=1 // pred_fallthru
      _
    %62 = vsyncpa [#allocation3], 1
    %63 = vsyncpa [#allocation6], 1
    %64 = vsyncpa [#allocation4], 1

</llo_original>
